<compile_context>
chip_gen: v7x
topology: tpu7x:2x2x1
jax: 0.10.0
libtpu: 0.0.40
codegen_flags: <defaults>
</compile_context>

<pallas_src>
import numpy as np
import jax
import jax.numpy as jnp
from jax.experimental import pallas as pl
from jax.experimental.pallas import tpu as pltpu

CLAMP_MIN = 100.0  # module globals: min = 100
CLAMP_MAX = 100.0  # module globals: max = 100

# Fixed small problem size (consistent with the module): batch=2, 1 channel, 16x16.
N = 2
H = W = 16
C1 = 16            # conv1 out channels
C2 = 32            # conv2 out channels
PH = PW = 4        # spatial after conv1(s2) + 2x2 maxpool
OH2 = OW2 = 2      # conv2 output spatial (stride 2, pad 1)

# Single constant weight slab (lane-dense, 128 lanes), row regions:
#   rows   0: 48  G1 stacked over kh : [kh*16 + w, dw*64 + pw*16 + c]  = w1[c,0,kh,kw]
#   rows  48: 64  R1_cat (cols 0:96) : [dh*8 + ph*2 + n, kh*32 + n*16 + h] = 1
#   rows  64:320  W2 big weight      : [ph*64 + pw*16 + c, oh2*64 + ow2*32 + c2] = w2[c2,c,kh,kw]
_R1_ROW0 = 3 * W                 # 48
_W2_ROW0 = _R1_ROW0 + 2 * N * PH  # 64
SLAB_ROWS = _W2_ROW0 + PH * PW * C1  # 320


# ---------------- fused Pallas kernel (one pallas_call, no grid) ----------------

def _fused_kernel(x_ref, w_ref, o_ref, va_ref):
    xf = x_ref[...]                                                    # (32, 16)

    # ---- conv1, matmul 1: all three kernel rows at once ----
    # T[n*16+h, kh*128 + dw*64+pw*16+c] = per-input-row, per-kh width/channel contraction
    g1_cat = jnp.concatenate(
        [w_ref[0:16, :], w_ref[16:32, :], w_ref[32:48, :]], axis=1)    # (16, 384)
    t = jnp.dot(xf, g1_cat, preferred_element_type=jnp.float32)        # (32, 384)

    # restack the three 128-lane blocks along rows (128-aligned static slices, ~free)
    t_stack = jnp.concatenate(
        [t[:, 0:128], t[:, 128:256], t[:, 256:384]], axis=0)           # (96, 128)

    # ---- conv1, matmul 2: stride-2 row selection + padding + kh-sum in one matmul ----
    r1_cat = w_ref[48:64, :][:, 0:96]                                  # (16, 96)
    v1 = jnp.dot(r1_cat, t_stack, preferred_element_type=jnp.float32)  # (16, 128)
    # v1 rows = dh*8 + ph*2 + n,  cols = dw*64 + pw*16 + c   (oh1 = 2ph+dh, ow1 = 2pw+dw)

    # ---- maxpool 2x2 stride 2: two halving maxima ----
    tdh = jnp.maximum(v1[0:8, :], v1[8:16, :])                         # (8, 128) max over dh
    m = jnp.maximum(tdh[:, 0:64], tdh[:, 64:128])                      # (8, 64)  max over dw
    # m rows = ph*2 + n, cols = pw*16 + c

    # ---- relayout ph from rows to lanes through a tiny VMEM scratch (static stores) ----
    va_ref[:, 0:64]    = m[0:2, :]
    va_ref[:, 64:128]  = m[2:4, :]
    va_ref[:, 128:192] = m[4:6, :]
    va_ref[:, 192:256] = m[6:8, :]
    v2a = va_ref[...]                                                  # (2, 256) [n, ph*64+pw*16+c]

    # ---- conv2: ONE matmul; stride/pad/output-position folded into the packed weight ----
    w2 = w_ref[64:320, :]                                              # (256, 128)
    v3 = jnp.dot(v2a, w2, preferred_element_type=jnp.float32)          # (2, 128)

    # clamp_min then clamp_max (min == max == 100 -> constant 100, kept general)
    v3 = jnp.maximum(v3, jnp.float32(CLAMP_MIN))
    v3 = jnp.minimum(v3, jnp.float32(CLAMP_MAX))
    o_ref[...] = v3                                                    # lane-dense (2, 128)


# ---------------- host-side weight pre-packing (runs once, outside jit) ----------------

def pack_params(w1, w2):
    """Pack PyTorch-layout conv weights into the single (320, 128) f32 slab.

    w1: (C1, 1, 3, 3) conv1 weight,  w2: (C2, C1, 3, 3) conv2 weight.
    Out-of-range shifts are simply absent -> zero rows/cols implement the padding.
    """
    w1 = np.asarray(w1, np.float32)
    w2 = np.asarray(w2, np.float32)
    slab = np.zeros((SLAB_ROWS, 128), np.float32)

    # region 0 (rows 0:48): G1 stacked over kh (width/kw/channel contraction, pool-ordered)
    for kh in range(3):
        for kw in range(3):
            for dw in range(2):
                for pw in range(PW):
                    wcol = 4 * pw + 2 * dw + kw - 1
                    if 0 <= wcol < W:
                        c0 = dw * 64 + pw * C1
                        slab[kh * W + wcol, c0:c0 + C1] = w1[:, 0, kh, kw]

    # region 1 (rows 48:64): R1_cat 0/1 row selection (stride-2 shift + kh accumulation)
    for kh in range(3):
        for dh in range(2):
            for ph in range(PH):
                for n in range(N):
                    h = 4 * ph + 2 * dh + kh - 1
                    if 0 <= h < H:
                        slab[_R1_ROW0 + dh * 8 + ph * 2 + n, kh * 32 + n * H + h] = 1.0

    # region 2 (rows 64:320): conv2 big weight, selection + contraction fully folded in
    for oh2 in range(OH2):
        for ow2 in range(OW2):
            for kh in range(3):
                for kw in range(3):
                    ph = 2 * oh2 + kh - 1
                    pw = 2 * ow2 + kw - 1
                    if 0 <= ph < PH and 0 <= pw < PW:
                        r0 = _W2_ROW0 + ph * 64 + pw * C1
                        c0 = oh2 * 64 + ow2 * C2
                        slab[r0:r0 + C1, c0:c0 + C2] = w2[:, :, kh, kw].T
    return jnp.asarray(slab)


# ---------------- forward pass (single fused pallas_call, 2 inputs) ----------------

def _full_spec(shape):
    # whole-array block, no grid -> (8,128) divisibility waived
    return pl.BlockSpec(shape, lambda: (0,) * len(shape))


@jax.jit
def model_forward(x_nchw, slab):
    # NCHW with a single input channel -> (N*H, W) f32 (pure layout glue, 2 KiB)
    xf = x_nchw.reshape(N * H, W).astype(jnp.float32)
    out2d = pl.pallas_call(
        _fused_kernel,
        out_shape=jax.ShapeDtypeStruct((N, OH2 * OW2 * C2), jnp.float32),   # (2, 128)
        in_specs=[
            _full_spec((N * H, W)),
            _full_spec((SLAB_ROWS, 128)),
        ],
        out_specs=_full_spec((N, OH2 * OW2 * C2)),
        scratch_shapes=[pltpu.VMEM((N, PH * PW * C1), jnp.float32)],        # (2, 256) relayout
    )(xf, slab)
    # (n, oh2*64 + ow2*32 + c2) -> NCHW (tiny, 1 KiB)
    return jnp.transpose(out2d.reshape(N, OH2, OW2, C2), (0, 3, 1, 2))


if __name__ == "__main__":
    key = jax.random.PRNGKey(0)
    kx, k1, k2 = jax.random.split(key, 3)
    # small shapes consistent with the module: batch=2, 1 input channel, 16x16 spatial
    x = jax.random.normal(kx, (N, 1, H, W), dtype=jnp.float32)
    # deterministic in-script parameter init (same shapes as the nn.Conv2d weights)
    w1 = jax.random.normal(k1, (C1, 1, 3, 3), dtype=jnp.float32) * (1.0 / 3.0)
    w2 = jax.random.normal(k2, (C2, C1, 3, 3), dtype=jnp.float32) * (1.0 / 12.0)

    # pre-pack all constant weights once into a single lane-dense slab (outside jit)
    slab = pack_params(np.asarray(w1), np.asarray(w2))

    out = model_forward(x, slab)
    out = jax.block_until_ready(out)
    # (2,1,16,16) -> conv1 s2 -> (2,16,8,8) -> maxpool -> (2,16,4,4) -> conv2 s2 -> (2,32,2,2)
    assert out.shape == (N, C2, OH2, OW2), out.shape
    assert out.dtype == jnp.float32
    # degenerate clamp (min == max == 100) => output is exactly 100 everywhere
    assert bool(jnp.all(out == 100.0))
    print("KERNEL_OK")
</pallas_src>

<mosaic_0001>
module attributes {stable_mosaic.version = 11 : i64} {
  func.func @_fused_kernel(%arg0: memref<32x16xf32, #tpu.memory_space<vmem>>, %arg1: memref<320x128xf32, #tpu.memory_space<vmem>>, %arg2: memref<2x128xf32, #tpu.memory_space<vmem>>, %arg3: memref<2x256xf32, #tpu.memory_space<vmem>>) attributes {dimension_semantics = [], scalar_prefetch = 0 : i64, scratch_operands = 1 : i64, tpu.core_type = #tpu.core_type<tc>} {
    %c0 = arith.constant 0 : index
    %c0_0 = arith.constant 0 : index
    %0 = vector.load %arg0[%c0, %c0_0] : memref<32x16xf32, #tpu.memory_space<vmem>>, vector<32x16xf32>
    %c0_1 = arith.constant 0 : index
    %c0_2 = arith.constant 0 : index
    %1 = vector.load %arg1[%c0_1, %c0_2] : memref<320x128xf32, #tpu.memory_space<vmem>>, vector<16x128xf32>
    %c16 = arith.constant 16 : index
    %c0_3 = arith.constant 0 : index
    %2 = vector.load %arg1[%c16, %c0_3] : memref<320x128xf32, #tpu.memory_space<vmem>>, vector<16x128xf32>
    %c32 = arith.constant 32 : index
    %c0_4 = arith.constant 0 : index
    %3 = vector.load %arg1[%c32, %c0_4] : memref<320x128xf32, #tpu.memory_space<vmem>>, vector<16x128xf32>
    %4 = tpu.concatenate %1, %2, %3 in 1 : vector<16x128xf32>, vector<16x128xf32>, vector<16x128xf32> -> vector<16x384xf32>
    %cst = arith.constant dense<0.000000e+00> : vector<32x384xf32>
    %5 = tpu.matmul %0, %4, %cst {dimension_numbers = #tpu.dot_dimension_numbers<[1], [0], [0], [1], [0, 0, 1, 1], [], []>} : vector<32x16xf32>, vector<16x384xf32>, vector<32x384xf32> -> vector<32x384xf32>
    %6 = vector.extract_strided_slice %5 {offsets = [0, 0], sizes = [32, 128], strides = [1, 1]} : vector<32x384xf32> to vector<32x128xf32>
    %7 = vector.extract_strided_slice %5 {offsets = [0, 128], sizes = [32, 128], strides = [1, 1]} : vector<32x384xf32> to vector<32x128xf32>
    %8 = vector.extract_strided_slice %5 {offsets = [0, 256], sizes = [32, 128], strides = [1, 1]} : vector<32x384xf32> to vector<32x128xf32>
    %9 = tpu.concatenate %6, %7, %8 in 0 : vector<32x128xf32>, vector<32x128xf32>, vector<32x128xf32> -> vector<96x128xf32>
    %c48 = arith.constant 48 : index
    %c0_5 = arith.constant 0 : index
    %10 = vector.load %arg1[%c48, %c0_5] : memref<320x128xf32, #tpu.memory_space<vmem>>, vector<16x128xf32>
    %11 = vector.extract_strided_slice %10 {offsets = [0, 0], sizes = [16, 96], strides = [1, 1]} : vector<16x128xf32> to vector<16x96xf32>
    %cst_6 = arith.constant dense<0.000000e+00> : vector<16x128xf32>
    %12 = tpu.matmul %11, %9, %cst_6 {dimension_numbers = #tpu.dot_dimension_numbers<[1], [0], [0], [1], [0, 0, 1, 1], [], []>} : vector<16x96xf32>, vector<96x128xf32>, vector<16x128xf32> -> vector<16x128xf32>
    %13 = vector.extract_strided_slice %12 {offsets = [0, 0], sizes = [8, 128], strides = [1, 1]} : vector<16x128xf32> to vector<8x128xf32>
    %14 = vector.extract_strided_slice %12 {offsets = [8, 0], sizes = [8, 128], strides = [1, 1]} : vector<16x128xf32> to vector<8x128xf32>
    %15 = arith.maximumf %13, %14 : vector<8x128xf32>
    %16 = vector.extract_strided_slice %15 {offsets = [0, 0], sizes = [8, 64], strides = [1, 1]} : vector<8x128xf32> to vector<8x64xf32>
    %17 = vector.extract_strided_slice %15 {offsets = [0, 64], sizes = [8, 64], strides = [1, 1]} : vector<8x128xf32> to vector<8x64xf32>
    %18 = arith.maximumf %16, %17 : vector<8x64xf32>
    %19 = vector.extract_strided_slice %18 {offsets = [0, 0], sizes = [2, 64], strides = [1, 1]} : vector<8x64xf32> to vector<2x64xf32>
    %c0_7 = arith.constant 0 : index
    %c0_8 = arith.constant 0 : index
    %20 = vector.load %arg3[%c0_7, %c0_8] : memref<2x256xf32, #tpu.memory_space<vmem>>, vector<2x64xf32>
    tpu.vector_store %arg3[%c0_7, %c0_8], %19 {strides = array<i32>} : memref<2x256xf32, #tpu.memory_space<vmem>>, vector<2x64xf32>,
    %21 = vector.extract_strided_slice %18 {offsets = [2, 0], sizes = [2, 64], strides = [1, 1]} : vector<8x64xf32> to vector<2x64xf32>
    %c0_9 = arith.constant 0 : index
    %c64 = arith.constant 64 : index
    %22 = vector.load %arg3[%c0_9, %c64] : memref<2x256xf32, #tpu.memory_space<vmem>>, vector<2x64xf32>
    tpu.vector_store %arg3[%c0_9, %c64], %21 {strides = array<i32>} : memref<2x256xf32, #tpu.memory_space<vmem>>, vector<2x64xf32>,
    %23 = vector.extract_strided_slice %18 {offsets = [4, 0], sizes = [2, 64], strides = [1, 1]} : vector<8x64xf32> to vector<2x64xf32>
    %c0_10 = arith.constant 0 : index
    %c128 = arith.constant 128 : index
    %24 = vector.load %arg3[%c0_10, %c128] : memref<2x256xf32, #tpu.memory_space<vmem>>, vector<2x64xf32>
    tpu.vector_store %arg3[%c0_10, %c128], %23 {strides = array<i32>} : memref<2x256xf32, #tpu.memory_space<vmem>>, vector<2x64xf32>,
    %25 = vector.extract_strided_slice %18 {offsets = [6, 0], sizes = [2, 64], strides = [1, 1]} : vector<8x64xf32> to vector<2x64xf32>
    %c0_11 = arith.constant 0 : index
    %c192 = arith.constant 192 : index
    %26 = vector.load %arg3[%c0_11, %c192] : memref<2x256xf32, #tpu.memory_space<vmem>>, vector<2x64xf32>
    tpu.vector_store %arg3[%c0_11, %c192], %25 {strides = array<i32>} : memref<2x256xf32, #tpu.memory_space<vmem>>, vector<2x64xf32>,
    %c0_12 = arith.constant 0 : index
    %c0_13 = arith.constant 0 : index
    %27 = vector.load %arg3[%c0_12, %c0_13] : memref<2x256xf32, #tpu.memory_space<vmem>>, vector<2x256xf32>
    %c64_14 = arith.constant 64 : index
    %c0_15 = arith.constant 0 : index
    %28 = vector.load %arg1[%c64_14, %c0_15] : memref<320x128xf32, #tpu.memory_space<vmem>>, vector<256x128xf32>
    %cst_16 = arith.constant dense<0.000000e+00> : vector<2x128xf32>
    %29 = tpu.matmul %27, %28, %cst_16 {dimension_numbers = #tpu.dot_dimension_numbers<[1], [0], [0], [1], [0, 0, 1, 1], [], []>} : vector<2x256xf32>, vector<256x128xf32>, vector<2x128xf32> -> vector<2x128xf32>
    %cst_17 = arith.constant 1.000000e+02 : f32
    %30 = vector.broadcast %cst_17 : f32 to vector<2x128xf32>
    %31 = arith.maximumf %29, %30 : vector<2x128xf32>
    %cst_18 = arith.constant 1.000000e+02 : f32
    %32 = vector.broadcast %cst_18 : f32 to vector<2x128xf32>
    %33 = arith.minimumf %31, %32 : vector<2x128xf32>
    %c0_19 = arith.constant 0 : index
    %c0_20 = arith.constant 0 : index
    %34 = vector.load %arg2[%c0_19, %c0_20] : memref<2x128xf32, #tpu.memory_space<vmem>>, vector<2x128xf32>
    tpu.vector_store %arg2[%c0_19, %c0_20], %33 {strides = array<i32>} : memref<2x128xf32, #tpu.memory_space<vmem>>, vector<2x128xf32>,
    return
  }
}

</mosaic_0001>

<llo_original>
// kernel: model_forward.1
$region0: #{model_forward.1}
  #allocation0 [shape = 'u32[]', space=smem, size = 0x4, offset = 0x4, fixed_abs, tag = 'smem constant byte address 0x4 - core index']
  #allocation1 [shape = 'u32[144,128]{1,0:T(1,128)}', space=vmem, size = 0x12000, scoped, tag = 'internal scratch']
  #allocation2 [shape = 'f32[2,256]{1,0:T(2,128)}', space=vmem, size = 0x800, scoped, tag = 'scratch operand']
  %s0 = inlined_call_operand.hbm [shape: f32[32,16], index: 0, kind: input, shape index: {}]
  %s1 = inlined_call_operand.hbm [shape: f32[320,128], index: 1, kind: input, shape index: {}]
  %s2 = inlined_call_operand.vmem [shape: f32[2,128], index: 2, kind: output, shape index: {}]
  %s3 = sld [smem:[#allocation0]]
  $region26: #{model_forward.1} parent=0
    _
  %s5 = ssub.s32 1, %s3
  %s6 = scalar_select 0, %s5, %s3
  $region1: #{model_forward.1} parent=0
    #allocation3 [shape = 'u8[16384]{0}', space=vmem, size = 0x4000, scoped, tag = 'input window, operand 0, single buffered']
    #allocation4 [shape = 's32[1]{0}', space=sflag, size = 0x4, scoped, tag = 'scoped memory for model_forward.1']
    #allocation5 [shape = 'u8[163840]{0}', space=vmem, size = 0x28000, scoped, tag = 'input window, operand 1, single buffered']
    #allocation6 [shape = 's32[1]{0}', space=sflag, size = 0x4, scoped, tag = 'scoped memory for model_forward.1']
    %7 = vsyncpa [#allocation4], 0
    %8 = vsyncpa [#allocation6], 0
    // Predicated region
    $region2: #{model_forward.1} parent=1 // pred_check
      _
    $region3: #{model_forward.1} parent=1 // pred_check_branch
      %10 = sbr.rel (0) target = $region5
    $region4: #{model_forward.1} parent=1 // pred_region
      %s12 = ssub.s32 512, 512
      %13 = vsyncadd [#allocation4], %s12
      %s14 = sshll.u32 [#allocation3], 4
      %s15 = int_to_ptr.vmem [resolvable:$true] %s14
      %20 = dma.hbm_to_vmem [thread:$0]  %s0, 512, %s15, [#allocation4], 128, 128, 8
    $region5: #{model_forward.1} parent=1 // pred_fallthru
      _
    // Predicated region
    $region6: #{model_forward.1} parent=1 // pred_check
      _
    $region7: #{model_forward.1} parent=1 // pred_check_branch
      %22 = sbr.rel (0) target = $region9
    $region8: #{model_forward.1} parent=1 // pred_region
      %s24 = ssub.s32 5120, 5120
      %25 = vsyncadd [#allocation6], %s24
      %s26 = sshll.u32 [#allocation5], 4
      %s27 = int_to_ptr.vmem [resolvable:$true] %s26
      %32 = dma.hbm_to_vmem [thread:$0]  %s1, 5120, %s27, [#allocation6], 128, 128, 8
    $region9: #{model_forward.1} parent=1 // pred_fallthru
      _
    // Predicated region
    $region10: #{model_forward.1} parent=1 // pred_check
      _
    $region11: #{model_forward.1} parent=1 // pred_check_branch
      %34 = sbr.rel (0) target = $region13
    $region12: #{model_forward.1} parent=1 // pred_region
      %35 = dma.done [#allocation4], 512
    $region13: #{model_forward.1} parent=1 // pred_fallthru
      _
    // Predicated region
    $region14: #{model_forward.1} parent=1 // pred_check
      _
    $region15: #{model_forward.1} parent=1 // pred_check_branch
      %37 = sbr.rel (0) target = $region17
    $region16: #{model_forward.1} parent=1 // pred_region
      %38 = dma.done [#allocation6], 5120
    $region17: #{model_forward.1} parent=1 // pred_fallthru
      _
    %v39 = vld [vmem:[#allocation3] sm:$0xff]
    %v40 = vld [vmem:[#allocation3 + $0x8] sm:$0xff]
    %v41 = vld [vmem:[#allocation3 + $0x10] sm:$0xff]
    %v42 = vld [vmem:[#allocation3 + $0x18] sm:$0xff]
    %v43 = vld [vmem:[#allocation5] sm:$0xff]
    %v44 = vld [vmem:[#allocation5 + $0x8] sm:$0xff]
    %v45 = vld [vmem:[#allocation5 + $0x10] sm:$0xff]
    %v46 = vld [vmem:[#allocation5 + $0x18] sm:$0xff]
    %v47 = vld [vmem:[#allocation5 + $0x20] sm:$0xff]
    %v48 = vld [vmem:[#allocation5 + $0x28] sm:$0xff]
    %vm49 = vcmask 130048
    %v51 = vsel %vm49, %v39, 0
    %v54 = vsel %vm49, %v40, 0
    %v57 = vsel %vm49, %v41, 0
    %v60 = vsel %vm49, %v42, 0
    %62 = vmatprep.subr.mxu0 %v45
    %63 = vmatpush1.msra.mxu0 %v43
    %64 = vmatprep.subr.mxu0 %v46
    %65 = vmatpush1.msra.mxu0 %v44
    %66 = vmatprep.subr.mxu0 0.0
    %67 = vmatpush1.msra.mxu0 0.0
    %68 = vmatprep.subr.mxu0 0.0
    %69 = vmatpush1.msra.mxu0 0.0
    %70 = vmatprep.subr.mxu0 0.0
    %71 = vmatpush1.msra.mxu0 0.0
    %72 = vmatprep.subr.mxu0 0.0
    %73 = vmatpush1.msra.mxu0 0.0
    %74 = vmatprep.subr.mxu0 0.0
    %75 = vmatpush1.msra.mxu0 0.0
    %76 = vmatprep.subr.mxu0 0.0
    %77 = vmatpush1.msra.mxu0 0.0
    %78 = vmatprep.subr.mxu0 0.0
    %79 = vmatpush1.msra.mxu0 0.0
    %80 = vmatprep.subr.mxu0 0.0
    %81 = vmatpush1.msra.mxu0 0.0
    %82 = vmatprep.subr.mxu0 0.0
    %83 = vmatpush1.msra.mxu0 0.0
    %84 = vmatprep.subr.mxu0 0.0
    %85 = vmatpush1.msra.mxu0 0.0
    %86 = vmatprep.subr.mxu0 0.0
    %87 = vmatpush1.msra.mxu0 0.0
    %88 = vmatprep.subr.mxu0 0.0
    %89 = vmatpush1.msra.mxu0 0.0
    %90 = vmatprep.subr.mxu0 0.0
    %91 = vmatpush1.msra.mxu0 0.0
    %92 = vmatprep.subr.mxu0 0.0
    %93 = vmatpush1.msra.mxu0 0.0
    %94 = vmatprep.subr.mxu0 0.0
    %95 = vmatpush1.msra.mxu0 0.0
    %96 = vmatprep.subr.mxu0 0.0
    %97 = vmatpush1.msra.mxu0 0.0
    %98 = vmatprep.subr.mxu0 0.0
    %99 = vmatpush1.msra.mxu0 0.0
    %100 = vmatprep.subr.mxu0 0.0
    %101 = vmatpush1.msra.mxu0 0.0
    %102 = vmatprep.subr.mxu0 0.0
    %103 = vmatpush1.msra.mxu0 0.0
    %104 = vmatprep.subr.mxu0 0.0
    %105 = vmatpush1.msra.mxu0 0.0
    %106 = vmatprep.subr.mxu0 0.0
    %107 = vmatpush1.msra.mxu0 0.0
    %108 = vmatprep.subr.mxu0 0.0
    %109 = vmatpush1.msra.mxu0 0.0
    %110 = vmatprep.subr.mxu0 0.0
    %111 = vmatpush1.msra.mxu0 0.0
    %112 = vmatprep.subr.mxu0 0.0
    %113 = vmatpush1.msra.mxu0 0.0
    %114 = vmatprep.subr.mxu0 0.0
    %115 = vmatpush1.msra.mxu0 0.0
    %116 = vmatprep.subr.mxu0 0.0
    %117 = vmatpush1.msra.mxu0 0.0
    %118 = vmatprep.subr.mxu0 0.0
    %119 = vmatpush1.msra.mxu0 0.0
    %120 = vmatprep.subr.mxu0 0.0
    %121 = vmatpush1.msra.mxu0 0.0
    %122 = vmatprep.subr.mxu0 0.0
    %123 = vmatpush1.msra.mxu0 0.0
    %124 = vmatprep.subr.mxu0 0.0
    %125 = vmatpush1.msra.mxu0 0.0
    %126 = vmatprep.mubr.f32.mxu0 0.0
    %127 = vmatmul.mubr.f32.gmra.mrb[0].mxu0 %v51
    %v128 = vpop.f32.mrb[0].mxu0
    %v129 = vadd.f32 0.0, %v128
    %v130 = vpop.f32.mrb[0].mxu0
    %v131 = vadd.f32 0.0, %v130
    %132 = vmatprep.mubr.f32.mxu0 0.0
    %133 = vmatmul.mubr.f32.gmra.mrb[0].mxu0 %v54
    %v134 = vpop.f32.mrb[0].mxu0
    %v135 = vadd.f32 0.0, %v134
    %v136 = vpop.f32.mrb[0].mxu0
    %v137 = vadd.f32 0.0, %v136
    %138 = vmatprep.mubr.f32.mxu0 0.0
    %139 = vmatmul.mubr.f32.gmra.mrb[0].mxu0 %v57
    %v140 = vpop.f32.mrb[0].mxu0
    %v141 = vadd.f32 0.0, %v140
    %v142 = vpop.f32.mrb[0].mxu0
    %v143 = vadd.f32 0.0, %v142
    %144 = vmatprep.mubr.f32.mxu0 0.0
    %145 = vmatmul.mubr.f32.gmra.mrb[0].mxu0 %v60
    %v146 = vpop.f32.mrb[0].mxu0
    %v147 = vadd.f32 0.0, %v146
    %v148 = vpop.f32.mrb[0].mxu0
    %v149 = vadd.f32 0.0, %v148
    %150 = vdwg.mxu0
    %151 = vmatprep.subr.mxu0 0.0
    %152 = vmatpush1.msra.mxu0 %v47
    %153 = vmatprep.subr.mxu0 0.0
    %154 = vmatpush1.msra.mxu0 %v48
    %155 = vmatprep.subr.mxu0 0.0
    %156 = vmatpush1.msra.mxu0 0.0
    %157 = vmatprep.subr.mxu0 0.0
    %158 = vmatpush1.msra.mxu0 0.0
    %159 = vmatprep.subr.mxu0 0.0
    %160 = vmatpush1.msra.mxu0 0.0
    %161 = vmatprep.subr.mxu0 0.0
    %162 = vmatpush1.msra.mxu0 0.0
    %163 = vmatprep.subr.mxu0 0.0
    %164 = vmatpush1.msra.mxu0 0.0
    %165 = vmatprep.subr.mxu0 0.0
    %166 = vmatpush1.msra.mxu0 0.0
    %167 = vmatprep.subr.mxu0 0.0
    %168 = vmatpush1.msra.mxu0 0.0
    %169 = vmatprep.subr.mxu0 0.0
    %170 = vmatpush1.msra.mxu0 0.0
    %171 = vmatprep.subr.mxu0 0.0
    %172 = vmatpush1.msra.mxu0 0.0
    %173 = vmatprep.subr.mxu0 0.0
    %174 = vmatpush1.msra.mxu0 0.0
    %175 = vmatprep.subr.mxu0 0.0
    %176 = vmatpush1.msra.mxu0 0.0
    %177 = vmatprep.subr.mxu0 0.0
    %178 = vmatpush1.msra.mxu0 0.0
    %179 = vmatprep.subr.mxu0 0.0
    %180 = vmatpush1.msra.mxu0 0.0
    %181 = vmatprep.subr.mxu0 0.0
    %182 = vmatpush1.msra.mxu0 0.0
    %183 = vmatprep.subr.mxu0 0.0
    %184 = vmatpush1.msra.mxu0 0.0
    %185 = vmatprep.subr.mxu0 0.0
    %186 = vmatpush1.msra.mxu0 0.0
    %187 = vmatprep.subr.mxu0 0.0
    %188 = vmatpush1.msra.mxu0 0.0
    %189 = vmatprep.subr.mxu0 0.0
    %190 = vmatpush1.msra.mxu0 0.0
    %191 = vmatprep.subr.mxu0 0.0
    %192 = vmatpush1.msra.mxu0 0.0
    %193 = vmatprep.subr.mxu0 0.0
    %194 = vmatpush1.msra.mxu0 0.0
    %195 = vmatprep.subr.mxu0 0.0
    %196 = vmatpush1.msra.mxu0 0.0
    %197 = vmatprep.subr.mxu0 0.0
    %198 = vmatpush1.msra.mxu0 0.0
    %199 = vmatprep.subr.mxu0 0.0
    %200 = vmatpush1.msra.mxu0 0.0
    %201 = vmatprep.subr.mxu0 0.0
    %202 = vmatpush1.msra.mxu0 0.0
    %203 = vmatprep.subr.mxu0 0.0
    %204 = vmatpush1.msra.mxu0 0.0
    %205 = vmatprep.subr.mxu0 0.0
    %206 = vmatpush1.msra.mxu0 0.0
    %207 = vmatprep.subr.mxu0 0.0
    %208 = vmatpush1.msra.mxu0 0.0
    %209 = vmatprep.subr.mxu0 0.0
    %210 = vmatpush1.msra.mxu0 0.0
    %211 = vmatprep.subr.mxu0 0.0
    %212 = vmatpush1.msra.mxu0 0.0
    %213 = vmatprep.subr.mxu0 0.0
    %214 = vmatpush1.msra.mxu0 0.0
    %215 = vmatprep.mubr.f32.mxu0 0.0
    %216 = vmatmul.mubr.f32.gmra.mrb[0].mxu0 %v51
    %v217 = vpop.f32.mrb[0].mxu0
    %v218 = vadd.f32 0.0, %v217
    %v219 = vpop.f32.mrb[0].mxu0
    %220 = vmatprep.mubr.f32.mxu0 0.0
    %221 = vmatmul.mubr.f32.gmra.mrb[0].mxu0 %v54
    %v222 = vpop.f32.mrb[0].mxu0
    %v223 = vadd.f32 0.0, %v222
    %v224 = vpop.f32.mrb[0].mxu0
    %225 = vmatprep.mubr.f32.mxu0 0.0
    %226 = vmatmul.mubr.f32.gmra.mrb[0].mxu0 %v57
    %v227 = vpop.f32.mrb[0].mxu0
    %v228 = vadd.f32 0.0, %v227
    %v229 = vpop.f32.mrb[0].mxu0
    %230 = vmatprep.mubr.f32.mxu0 0.0
    %231 = vmatmul.mubr.f32.gmra.mrb[0].mxu0 %v60
    %v232 = vpop.f32.mrb[0].mxu0
    %v233 = vadd.f32 0.0, %v232
    %v234 = vpop.f32.mrb[0].mxu0
    %235 = vdwg.mxu0
    %v236 = vld [vmem:[#allocation5 + $0x30] sm:$0xff]
    %v237 = vld [vmem:[#allocation5 + $0x38] sm:$0xff]
    %vm238 = vcmask 785408
    %v240 = vsel %vm238, %v236, 0
    %v243 = vsel %vm238, %v237, 0
    %245 = vmatprep.subr.mxu0 0.0
    %246 = vmatpush1.msra.mxu0 %v129
    %247 = vmatprep.subr.mxu0 0.0
    %248 = vmatpush1.msra.mxu0 %v135
    %249 = vmatprep.subr.mxu0 0.0
    %250 = vmatpush1.msra.mxu0 %v141
    %251 = vmatprep.subr.mxu0 0.0
    %252 = vmatpush1.msra.mxu0 %v147
    %253 = vmatprep.subr.mxu0 0.0
    %254 = vmatpush1.msra.mxu0 %v131
    %255 = vmatprep.subr.mxu0 0.0
    %256 = vmatpush1.msra.mxu0 %v137
    %257 = vmatprep.subr.mxu0 0.0
    %258 = vmatpush1.msra.mxu0 %v143
    %259 = vmatprep.subr.mxu0 0.0
    %260 = vmatpush1.msra.mxu0 %v149
    %261 = vmatprep.subr.mxu0 0.0
    %262 = vmatpush1.msra.mxu0 %v218
    %263 = vmatprep.subr.mxu0 0.0
    %264 = vmatpush1.msra.mxu0 %v223
    %265 = vmatprep.subr.mxu0 0.0
    %266 = vmatpush1.msra.mxu0 %v228
    %267 = vmatprep.subr.mxu0 0.0
    %268 = vmatpush1.msra.mxu0 %v233
    %269 = vmatprep.subr.mxu0 0.0
    %270 = vmatpush1.msra.mxu0 0.0
    %271 = vmatprep.subr.mxu0 0.0
    %272 = vmatpush1.msra.mxu0 0.0
    %273 = vmatprep.subr.mxu0 0.0
    %274 = vmatpush1.msra.mxu0 0.0
    %275 = vmatprep.subr.mxu0 0.0
    %276 = vmatpush1.msra.mxu0 0.0
    %277 = vmatprep.subr.mxu0 0.0
    %278 = vmatpush1.msra.mxu0 0.0
    %279 = vmatprep.subr.mxu0 0.0
    %280 = vmatpush1.msra.mxu0 0.0
    %281 = vmatprep.subr.mxu0 0.0
    %282 = vmatpush1.msra.mxu0 0.0
    %283 = vmatprep.subr.mxu0 0.0
    %284 = vmatpush1.msra.mxu0 0.0
    %285 = vmatprep.subr.mxu0 0.0
    %286 = vmatpush1.msra.mxu0 0.0
    %287 = vmatprep.subr.mxu0 0.0
    %288 = vmatpush1.msra.mxu0 0.0
    %289 = vmatprep.subr.mxu0 0.0
    %290 = vmatpush1.msra.mxu0 0.0
    %291 = vmatprep.subr.mxu0 0.0
    %292 = vmatpush1.msra.mxu0 0.0
    %293 = vmatprep.subr.mxu0 0.0
    %294 = vmatpush1.msra.mxu0 0.0
    %295 = vmatprep.subr.mxu0 0.0
    %296 = vmatpush1.msra.mxu0 0.0
    %297 = vmatprep.subr.mxu0 0.0
    %298 = vmatpush1.msra.mxu0 0.0
    %299 = vmatprep.subr.mxu0 0.0
    %300 = vmatpush1.msra.mxu0 0.0
    %301 = vmatprep.subr.mxu0 0.0
    %302 = vmatpush1.msra.mxu0 0.0
    %303 = vmatprep.subr.mxu0 0.0
    %304 = vmatpush1.msra.mxu0 0.0
    %305 = vmatprep.subr.mxu0 0.0
    %306 = vmatpush1.msra.mxu0 0.0
    %307 = vmatprep.subr.mxu0 0.0
    %308 = vmatpush1.msra.mxu0 0.0
    %309 = vmatprep.mubr.f32.mxu0 0.0
    %310 = vmatmul.mubr.f32.gmra.mrb[0].mxu0 %v240
    %v311 = vpop.f32.mrb[0].mxu0
    %v312 = vadd.f32 0.0, %v311
    %v313 = vpop.f32.mrb[0].mxu0
    %314 = vmatprep.mubr.f32.mxu0 0.0
    %315 = vmatmul.mubr.f32.gmra.mrb[0].mxu0 %v243
    %v316 = vpop.f32.mrb[0].mxu0
    %v317 = vadd.f32 0.0, %v316
    %v318 = vpop.f32.mrb[0].mxu0
    %319 = vdwg.mxu0
    %v320 = vmax.f32 %v312, %v317
    %322 = vrot.lane.b32.xlu0 %v320, 64
    %v323 = vpop.permute.xlu0 %322
    %v325 = vmax.f32 %v320, %v323
    %vm326 = vcmask 517120
    %327 = vst.msk [vmem:[#allocation2] sm:$0x3] %vm326, %v325
    %v330 = vunpack.c.l.s4 1983009808
    %v331 = vunpack.c.0.s8 %v330
    %v332 = vlaneseq
    %v333 = vshrl.u32 %v332, 7
    %v334 = vsub.s32 %v331, %v333
    %v335 = vrot.slane %v325, %v334
    %v336 = vcombine.high %v335, %v335
    %337 = vrot.lane.b32.xlu0 %v336, 64
    %v338 = vpop.permute.xlu0 %337
    %vm340 = vcmask 1041920
    %341 = vst.msk [vmem:[#allocation2] sm:$0x3] %vm340, %v338
    %v342 = vcombine.high %v325, %v325
    %v344 = vunpack.c.l.s4 1983009808
    %v345 = vunpack.c.0.s8 %v344
    %v346 = vlaneseq
    %v347 = vshrl.u32 %v346, 7
    %v348 = vsub.s32 %v345, %v347
    %v349 = vrot.slane %v342, %v348
    %351 = vst.msk [vmem:[#allocation2 + $0x2] sm:$0x3] %vm326, %v349
    %v352 = vcombine.high %v349, %v349
    %353 = vrot.lane.b32.xlu0 %v352, 64
    %v354 = vpop.permute.xlu0 %353
    %356 = vst.msk [vmem:[#allocation2 + $0x2] sm:$0x3] %vm340, %v354
    %v357 = vld [vmem:[#allocation2] sm:$0xf]
    %v358 = vld [vmem:[#allocation5 + $0x40] sm:$0xff]
    %v359 = vld [vmem:[#allocation5 + $0x48] sm:$0xff]
    %v360 = vld [vmem:[#allocation5 + $0x50] sm:$0xff]
    %v361 = vld [vmem:[#allocation5 + $0x58] sm:$0xff]
    %v362 = vld [vmem:[#allocation5 + $0x60] sm:$0xff]
    %v363 = vld [vmem:[#allocation5 + $0x68] sm:$0xff]
    %v364 = vld [vmem:[#allocation5 + $0x70] sm:$0xff]
    %v365 = vld [vmem:[#allocation5 + $0x78] sm:$0xff]
    %v366 = vld [vmem:[#allocation5 + $0x80] sm:$0xff]
    %v367 = vld [vmem:[#allocation5 + $0x88] sm:$0xff]
    %v368 = vld [vmem:[#allocation5 + $0x90] sm:$0xff]
    %v369 = vld [vmem:[#allocation5 + $0x98] sm:$0xff]
    %v370 = vld [vmem:[#allocation5 + $0xa0] sm:$0xff]
    %v371 = vld [vmem:[#allocation5 + $0xa8] sm:$0xff]
    %v372 = vld [vmem:[#allocation5 + $0xb0] sm:$0xff]
    %v373 = vld [vmem:[#allocation5 + $0xb8] sm:$0xff]
    %v374 = vld [vmem:[#allocation5 + $0xc0] sm:$0xff]
    %v375 = vld [vmem:[#allocation5 + $0xc8] sm:$0xff]
    %v376 = vld [vmem:[#allocation5 + $0xd0] sm:$0xff]
    %v377 = vld [vmem:[#allocation5 + $0xd8] sm:$0xff]
    %v378 = vld [vmem:[#allocation5 + $0xe0] sm:$0xff]
    %v379 = vld [vmem:[#allocation5 + $0xe8] sm:$0xff]
    %v380 = vld [vmem:[#allocation5 + $0xf0] sm:$0xff]
    %v381 = vld [vmem:[#allocation5 + $0xf8] sm:$0xff]
    %v382 = vld [vmem:[#allocation5 + $0x100] sm:$0xff]
    %v383 = vld [vmem:[#allocation5 + $0x108] sm:$0xff]
    %v384 = vld [vmem:[#allocation5 + $0x110] sm:$0xff]
    %v385 = vld [vmem:[#allocation5 + $0x118] sm:$0xff]
    %v386 = vld [vmem:[#allocation5 + $0x120] sm:$0xff]
    %v387 = vld [vmem:[#allocation5 + $0x128] sm:$0xff]
    %v388 = vld [vmem:[#allocation5 + $0x130] sm:$0xff]
    %v389 = vld [vmem:[#allocation5 + $0x138] sm:$0xff]
    %v392 = vunpack.c.l.s4 1983009808
    %v393 = vunpack.c.0.s8 %v392
    %v394 = vlaneseq
    %v395 = vshrl.u32 %v394, 7
    %v396 = vsub.s32 %v393, %v395
    %v397 = vrot.slane %v357, %v396
    %v398 = vcombine.high %v397, %v397
    %401 = vmatprep.subr.mxu0 0.0
    %402 = vmatpush1.msra.mxu0 %v358
    %403 = vmatprep.subr.mxu0 0.0
    %404 = vmatpush1.msra.mxu0 %v359
    %405 = vmatprep.subr.mxu0 0.0
    %406 = vmatpush1.msra.mxu0 %v360
    %407 = vmatprep.subr.mxu0 0.0
    %408 = vmatpush1.msra.mxu0 %v361
    %409 = vmatprep.subr.mxu0 0.0
    %410 = vmatpush1.msra.mxu0 %v362
    %411 = vmatprep.subr.mxu0 0.0
    %412 = vmatpush1.msra.mxu0 %v363
    %413 = vmatprep.subr.mxu0 0.0
    %414 = vmatpush1.msra.mxu0 %v364
    %415 = vmatprep.subr.mxu0 0.0
    %416 = vmatpush1.msra.mxu0 %v365
    %417 = vmatprep.subr.mxu0 0.0
    %418 = vmatpush1.msra.mxu0 %v366
    %419 = vmatprep.subr.mxu0 0.0
    %420 = vmatpush1.msra.mxu0 %v367
    %421 = vmatprep.subr.mxu0 0.0
    %422 = vmatpush1.msra.mxu0 %v368
    %423 = vmatprep.subr.mxu0 0.0
    %424 = vmatpush1.msra.mxu0 %v369
    %425 = vmatprep.subr.mxu0 0.0
    %426 = vmatpush1.msra.mxu0 %v370
    %427 = vmatprep.subr.mxu0 0.0
    %428 = vmatpush1.msra.mxu0 %v371
    %429 = vmatprep.subr.mxu0 0.0
    %430 = vmatpush1.msra.mxu0 %v372
    %431 = vmatprep.subr.mxu0 0.0
    %432 = vmatpush1.msra.mxu0 %v373
    %433 = vmatprep.subr.mxu0 0.0
    %434 = vmatpush1.msra.mxu0 %v374
    %435 = vmatprep.subr.mxu0 0.0
    %436 = vmatpush1.msra.mxu0 %v375
    %437 = vmatprep.subr.mxu0 0.0
    %438 = vmatpush1.msra.mxu0 %v376
    %439 = vmatprep.subr.mxu0 0.0
    %440 = vmatpush1.msra.mxu0 %v377
    %441 = vmatprep.subr.mxu0 0.0
    %442 = vmatpush1.msra.mxu0 %v378
    %443 = vmatprep.subr.mxu0 0.0
    %444 = vmatpush1.msra.mxu0 %v379
    %445 = vmatprep.subr.mxu0 0.0
    %446 = vmatpush1.msra.mxu0 %v380
    %447 = vmatprep.subr.mxu0 0.0
    %448 = vmatpush1.msra.mxu0 %v381
    %449 = vmatprep.subr.mxu0 0.0
    %450 = vmatpush1.msra.mxu0 %v382
    %451 = vmatprep.subr.mxu0 0.0
    %452 = vmatpush1.msra.mxu0 %v383
    %453 = vmatprep.subr.mxu0 0.0
    %454 = vmatpush1.msra.mxu0 %v384
    %455 = vmatprep.subr.mxu0 0.0
    %456 = vmatpush1.msra.mxu0 %v385
    %457 = vmatprep.subr.mxu0 0.0
    %458 = vmatpush1.msra.mxu0 %v386
    %459 = vmatprep.subr.mxu0 0.0
    %460 = vmatpush1.msra.mxu0 %v387
    %461 = vmatprep.subr.mxu0 0.0
    %462 = vmatpush1.msra.mxu0 %v388
    %463 = vmatprep.subr.mxu0 0.0
    %464 = vmatpush1.msra.mxu0 %v389
    %465 = vmatprep.mubr.f32.mxu0 %v398
    %466 = vmatmul.mubr.f32.gmra.mrb[0].mxu0 %v397
    %v467 = vpop.f32.mrb[0].mxu0
    %v468 = vadd.f32 0.0, %v467
    %v469 = vpop.f32.mrb[0].mxu0
    %470 = vdwg.mxu0
    %v471 = vmax.f32 %v468, 100.0
    %v472 = vmin.f32 %v471, 100.0
    %473 = vst [vmem:[%s2] sm:$0x3] %v472
    // Predicated region
    $region18: #{model_forward.1} parent=1 // pred_check
      _
    $region19: #{model_forward.1} parent=1 // pred_check_branch
      %475 = sbr.rel (0) target = $region21
    $region20: #{model_forward.1} parent=1 // pred_region
      _
    $region21: #{model_forward.1} parent=1 // pred_fallthru
      _
    // Predicated region
    $region22: #{model_forward.1} parent=1 // pred_check
      _
    $region23: #{model_forward.1} parent=1 // pred_check_branch
      %477 = sbr.rel (0) target = $region25
    $region24: #{model_forward.1} parent=1 // pred_region
      _
    $region25: #{model_forward.1} parent=1 // pred_fallthru
      _
    %478 = vsyncpa [#allocation4], 1
    %479 = vsyncpa [#allocation6], 1

</llo_original>
